<compile_context>
chip_gen: v7x
topology: tpu7x:2x2x1
jax: 0.10.0
libtpu: 0.0.40
codegen_flags: <defaults>
</compile_context>

<pallas_src>
import functools

import jax
import jax.numpy as jnp
from jax.experimental import pallas as pl
from jax.experimental.pallas import tpu as pltpu

LANE = 128  # TPU vreg lane width


def _mlp_softmax_kernel(xT_ref, w1_ref, b1_ref, w2_ref, b2_ref, o_ref):
    # hT = relu(W1 @ xT + b1): [hidden, tile_b]
    h = jnp.dot(w1_ref[...], xT_ref[...], preferred_element_type=jnp.float32)
    h = jnp.maximum(h + b1_ref[...], 0.0)
    # logitsT = W2 @ hT + b2: [action, tile_b]
    logits = jnp.dot(w2_ref[...], h, preferred_element_type=jnp.float32) + b2_ref[...]
    # Numerically stable softmax over the action (sublane) axis == Softmax(dim=1)
    # in the original [B, act] layout.
    m = jnp.max(logits, axis=0, keepdims=True)
    e = jnp.exp(logits - m)
    denom = jnp.sum(e, axis=0, keepdims=True)
    o_ref[...] = (e / denom).astype(o_ref.dtype)
    # TODO(synk): if the ES loop only needs an action sample/argmax, fuse it here and
    # emit [B] int32 to shrink the output write even further.


def _round_up(n, mult):
    return ((n + mult - 1) // mult) * mult


@functools.partial(jax.jit, static_argnames=("tile_b",))
def net_forward(x, w1, b1, w2, b2, *, tile_b=512):
    """Forward pass of Net.

    x: [B, obs].  Params in nn.Linear layout: w1 [32, obs], b1 [32, 1],
    w2 [act, 32], b2 [act, 1].  Returns [B, act] action probabilities.
    """
    batch, obs_size = x.shape
    hidden = w1.shape[0]
    action_size = w2.shape[0]

    # Batch lives on lanes: lane-align it.  A pad copy only materializes when the
    # caller's batch is not already a multiple of 128.
    batch_p = _round_up(batch, LANE)
    tile = min(tile_b, batch_p)
    if batch_p % tile != 0:
        tile = batch_p  # single-block fallback; still correct, VMEM is tiny here

    xT = x.T  # [obs, B] -- cheap layout plumbing (obs * B floats)
    if batch_p != batch:
        xT = jnp.zeros((obs_size, batch_p), x.dtype).at[:, :batch].set(xT)

    out_T = pl.pallas_call(
        _mlp_softmax_kernel,
        out_shape=jax.ShapeDtypeStruct((action_size, batch_p), jnp.float32),
        grid=(batch_p // tile,),
        in_specs=[
            pl.BlockSpec((obs_size, tile), lambda i: (0, i)),       # xT, lane-tiled batch
            pl.BlockSpec((hidden, obs_size), lambda i: (0, 0)),     # W1 resident
            pl.BlockSpec((hidden, 1), lambda i: (0, 0)),            # b1 resident
            pl.BlockSpec((action_size, hidden), lambda i: (0, 0)),  # W2 resident
            pl.BlockSpec((action_size, 1), lambda i: (0, 0)),       # b2 resident
        ],
        out_specs=pl.BlockSpec((action_size, tile), lambda i: (0, i)),
        compiler_params=pltpu.CompilerParams(
            dimension_semantics=("parallel",),  # batch tiles shard across TCs on v7x
        ),
    )(xT, w1, b1, w2, b2)

    # [act, B] -> [B, act]; tiny (B * act floats), no padded lanes to strip.
    return out_T[:, :batch].T


def init_params(key, obs_size, hidden, action_size):
    """Deterministic init mirroring nn.Linear ([out, in] weights, uniform ±1/sqrt(fan_in))."""
    k1, k2, k3, k4 = jax.random.split(key, 4)
    lim1 = 1.0 / jnp.sqrt(obs_size)
    lim2 = 1.0 / jnp.sqrt(hidden)
    w1 = jax.random.uniform(k1, (hidden, obs_size), jnp.float32, -lim1, lim1)
    b1 = jax.random.uniform(k2, (hidden, 1), jnp.float32, -lim1, lim1)
    w2 = jax.random.uniform(k3, (action_size, hidden), jnp.float32, -lim2, lim2)
    b2 = jax.random.uniform(k4, (action_size, 1), jnp.float32, -lim2, lim2)
    return w1, b1, w2, b2


if __name__ == "__main__":
    # CartPole sizes: obs_size=4, action_size=2, hidden=32.
    # Batch represents a stacked ES population / vectorized env states in one call.
    obs_size, hidden, action_size = 4, 32, 2
    batch, tile_b = 1024, 512

    key = jax.random.PRNGKey(0)
    kx, kp = jax.random.split(key)
    x = jax.random.normal(kx, (batch, obs_size), dtype=jnp.float32)
    w1, b1, w2, b2 = init_params(kp, obs_size, hidden, action_size)

    out = jax.block_until_ready(net_forward(x, w1, b1, w2, b2, tile_b=tile_b))

    # Plain-JAX reference (same math as the PyTorch module).
    h_ref = jnp.maximum(x @ w1.T + b1.reshape(1, -1), 0.0)
    logits_ref = h_ref @ w2.T + b2.reshape(1, -1)
    ref = jax.nn.softmax(logits_ref, axis=1)

    assert out.shape == (batch, action_size), "wrong output shape"
    assert jnp.allclose(out, ref, atol=1e-5, rtol=1e-5), "mismatch vs reference"
    assert jnp.allclose(jnp.sum(out, axis=1), 1.0, atol=1e-5), "softmax rows must sum to 1"

    # Small, non-lane-multiple batch (exercises the pad + single-block fallback path).
    out_small = jax.block_until_ready(net_forward(x[:7], w1, b1, w2, b2, tile_b=tile_b))
    assert out_small.shape == (7, action_size), "small-batch wrong shape"
    assert jnp.allclose(out_small, ref[:7], atol=1e-5, rtol=1e-5), "small-batch mismatch"

    print("KERNEL_OK")
</pallas_src>

<mosaic_0001>
module attributes {stable_mosaic.version = 11 : i64} {
  func.func @_mlp_softmax_kernel(%arg0: i32, %arg1: memref<4x512xf32, #tpu.memory_space<vmem>>, %arg2: memref<32x4xf32, #tpu.memory_space<vmem>>, %arg3: memref<32x1xf32, #tpu.memory_space<vmem>>, %arg4: memref<2x32xf32, #tpu.memory_space<vmem>>, %arg5: memref<2x1xf32, #tpu.memory_space<vmem>>, %arg6: memref<2x512xf32, #tpu.memory_space<vmem>>) attributes {dimension_semantics = [#tpu.dimension_semantics<parallel>], iteration_bounds = array<i64: 2>, scalar_prefetch = 0 : i64, scratch_operands = 0 : i64, tpu.core_type = #tpu.core_type<tc>, window_params = [{transform_indices = @transform_0, window_bounds = array<i64: 4, 512>}, {pipeline_mode = #tpu.pipeline_mode<synchronous>, transform_indices = @transform_1, window_bounds = array<i64: 32, 4>}, {pipeline_mode = #tpu.pipeline_mode<synchronous>, transform_indices = @transform_2, window_bounds = array<i64: 32, 1>}, {pipeline_mode = #tpu.pipeline_mode<synchronous>, transform_indices = @transform_3, window_bounds = array<i64: 2, 32>}, {pipeline_mode = #tpu.pipeline_mode<synchronous>, transform_indices = @transform_4, window_bounds = array<i64: 2, 1>}, {transform_indices = @transform_5, window_bounds = array<i64: 2, 512>}]} {
    %c0 = arith.constant 0 : index
    %c0_0 = arith.constant 0 : index
    %0 = vector.load %arg2[%c0, %c0_0] : memref<32x4xf32, #tpu.memory_space<vmem>>, vector<32x4xf32>
    %c0_1 = arith.constant 0 : index
    %c0_2 = arith.constant 0 : index
    %1 = vector.load %arg1[%c0_1, %c0_2] : memref<4x512xf32, #tpu.memory_space<vmem>>, vector<4x512xf32>
    %cst = arith.constant dense<0.000000e+00> : vector<32x512xf32>
    %2 = tpu.matmul %0, %1, %cst {dimension_numbers = #tpu.dot_dimension_numbers<[1], [0], [0], [1], [0, 0, 1, 1], [], []>} : vector<32x4xf32>, vector<4x512xf32>, vector<32x512xf32> -> vector<32x512xf32>
    %c0_3 = arith.constant 0 : index
    %c0_4 = arith.constant 0 : index
    %3 = vector.load %arg3[%c0_3, %c0_4] : memref<32x1xf32, #tpu.memory_space<vmem>>, vector<32x1xf32>
    %4 = vector.broadcast %3 : vector<32x1xf32> to vector<32x512xf32>
    %5 = arith.addf %2, %4 : vector<32x512xf32>
    %cst_5 = arith.constant 0.000000e+00 : f32
    %6 = vector.broadcast %cst_5 : f32 to vector<32x512xf32>
    %7 = arith.maximumf %5, %6 : vector<32x512xf32>
    %c0_6 = arith.constant 0 : index
    %c0_7 = arith.constant 0 : index
    %8 = vector.load %arg4[%c0_6, %c0_7] : memref<2x32xf32, #tpu.memory_space<vmem>>, vector<2x32xf32>
    %cst_8 = arith.constant dense<0.000000e+00> : vector<2x512xf32>
    %9 = tpu.matmul %8, %7, %cst_8 {dimension_numbers = #tpu.dot_dimension_numbers<[1], [0], [0], [1], [0, 0, 1, 1], [], []>} : vector<2x32xf32>, vector<32x512xf32>, vector<2x512xf32> -> vector<2x512xf32>
    %c0_9 = arith.constant 0 : index
    %c0_10 = arith.constant 0 : index
    %10 = vector.load %arg5[%c0_9, %c0_10] : memref<2x1xf32, #tpu.memory_space<vmem>>, vector<2x1xf32>
    %11 = vector.broadcast %10 : vector<2x1xf32> to vector<2x512xf32>
    %12 = arith.addf %9, %11 : vector<2x512xf32>
    %cst_11 = arith.constant dense<0xFF800000> : vector<512xf32>
    %13 = vector.multi_reduction <maximumf>, %12, %cst_11 [0] : vector<2x512xf32> to vector<512xf32>
    %14 = vector.shape_cast %13 : vector<512xf32> to vector<1x512xf32>
    %15 = vector.broadcast %14 : vector<1x512xf32> to vector<2x512xf32>
    %16 = arith.subf %12, %15 : vector<2x512xf32>
    %17 = math.exp %16 : vector<2x512xf32>
    %cst_12 = arith.constant dense<0.000000e+00> : vector<512xf32>
    %18 = vector.multi_reduction <add>, %17, %cst_12 [0] : vector<2x512xf32> to vector<512xf32>
    %19 = vector.shape_cast %18 : vector<512xf32> to vector<1x512xf32>
    %20 = vector.broadcast %19 : vector<1x512xf32> to vector<2x512xf32>
    %21 = arith.divf %17, %20 : vector<2x512xf32>
    %c0_13 = arith.constant 0 : index
    %c0_14 = arith.constant 0 : index
    %22 = vector.load %arg6[%c0_13, %c0_14] : memref<2x512xf32, #tpu.memory_space<vmem>>, vector<2x512xf32>
    tpu.vector_store %arg6[%c0_13, %c0_14], %21 {strides = array<i32>} : memref<2x512xf32, #tpu.memory_space<vmem>>, vector<2x512xf32>,
    return
  }
  func.func @transform_0(%arg0: i32) -> (i32, i32) {
    %c0_i32 = arith.constant 0 : i32
    %c0_i32_0 = arith.constant 0 : i32
    return %c0_i32, %arg0 : i32, i32
  }
  func.func @transform_1(%arg0: i32) -> (i32, i32) {
    %c0_i32 = arith.constant 0 : i32
    %c0_i32_0 = arith.constant 0 : i32
    %c0_i32_1 = arith.constant 0 : i32
    return %c0_i32, %c0_i32_0 : i32, i32
  }
  func.func @transform_2(%arg0: i32) -> (i32, i32) {
    %c0_i32 = arith.constant 0 : i32
    %c0_i32_0 = arith.constant 0 : i32
    %c0_i32_1 = arith.constant 0 : i32
    return %c0_i32, %c0_i32_0 : i32, i32
  }
  func.func @transform_3(%arg0: i32) -> (i32, i32) {
    %c0_i32 = arith.constant 0 : i32
    %c0_i32_0 = arith.constant 0 : i32
    %c0_i32_1 = arith.constant 0 : i32
    return %c0_i32, %c0_i32_0 : i32, i32
  }
  func.func @transform_4(%arg0: i32) -> (i32, i32) {
    %c0_i32 = arith.constant 0 : i32
    %c0_i32_0 = arith.constant 0 : i32
    %c0_i32_1 = arith.constant 0 : i32
    return %c0_i32, %c0_i32_0 : i32, i32
  }
  func.func @transform_5(%arg0: i32) -> (i32, i32) {
    %c0_i32 = arith.constant 0 : i32
    %c0_i32_0 = arith.constant 0 : i32
    return %c0_i32, %arg0 : i32, i32
  }
}

</mosaic_0001>

<llo_original>
// kernel: net_forward.1
$region0: #{net_forward.1}
  #allocation0 [shape = 'u32[]', space=smem, size = 0x4, offset = 0x4, fixed_abs, tag = 'smem constant byte address 0x4 - core index']
  #allocation1 [shape = 'u32[144,128]{1,0:T(1,128)}', space=vmem, size = 0x12000, scoped, tag = 'internal scratch']
  %s0 = inlined_call_operand.vmem [shape: f32[4,1024], index: 0, kind: input, shape index: {}]
  %s1 = inlined_call_operand.vmem [shape: f32[32,4], index: 1, kind: input, shape index: {}]
  %s2 = inlined_call_operand.vmem [shape: f32[32,1], index: 2, kind: input, shape index: {}]
  %s3 = inlined_call_operand.vmem [shape: f32[2,32], index: 3, kind: input, shape index: {}]
  %s4 = inlined_call_operand.vmem [shape: f32[2,1], index: 4, kind: input, shape index: {}]
  %s5 = inlined_call_operand.hbm [shape: f32[2,1024], index: 5, kind: output, shape index: {}]
  %s6 = sld [smem:[#allocation0]]
  $region53: #{net_forward.1} parent=0
    _
  %s8 = ssub.s32 1, %s6
  %s9 = scalar_select 0, %s8, %s6
  $region1: #{net_forward.1} parent=0
    #allocation2 [shape = 'u8[8192]{0}', space=vmem, size = 0x2000, scoped, tag = 'output window, operand 0']
    #allocation3 [shape = 's32[2]{0}', space=sflag, size = 0x8, scoped, tag = 'scoped memory for net_forward.1']
    %10 = vsyncpa [#allocation3], 0
    %s11 = scalar_lea.sflag [#allocation3], 1
    %12 = vsyncpa %s11, 0
    loop: start=0, step=1, limit=4
    $region2: #{net_forward.1} parent=1 // loop_pre_header
      _
    $region3: #{net_forward.1} parent=1 // loop_header
      %s14 = sphi 0, %s18
      %p15 = scmp.ge.s32.totalorder %s14, 4
      %s24 = sphi 0, %s26
      %s27 = sphi 0, %s24
      %s28 = sphi 0, %s27
      %s44 = sphi 0, %s28
      %s48 = sphi 0, %s48
      %s50 = sphi 0, %s48
      %s51 = sphi 0, %s50
      %s65 = sphi 0, %s51
      %s69 = sphi 0, %s69
      %s71 = sphi 0, %s69
      %s72 = sphi 0, %s71
      %s86 = sphi 0, %s72
      %s90 = sphi 0, %s90
      %s92 = sphi 0, %s90
      %s93 = sphi 0, %s92
      %s107 = sphi 0, %s93
      %s111 = sphi 0, %s111
      %s113 = sphi 0, %s111
      %s114 = sphi 0, %s113
      %s128 = sphi 0, %s114
      %s134 = sphi 0, %s136
      %s137 = sphi 0, %s134
      %s138 = sphi 0, %s137
      %s154 = sphi 0, %s138
    $region4: #{net_forward.1} parent=1 // loop_header_branch
      %17 = sbr.rel (%p15) target = $region8
    $region5: #{net_forward.1} parent=1 // loop_body
      %s19 = ssub.s32 %s14, 1
      %s20 = ssub.s32 %s14, 2
      %s21 = sadd.s32 %s14, 1
      %s22 = ssub.s32 %s14, %s21
      %p23 = scmp.eq.s32.totalorder %s22, 0
      %s25 = sadd.s32 %s24, 1
      %s26 = scalar_select %p23, %s24, %s25
      %p29 = pneg %p23
      %p30 = scmp.eq.s32.totalorder %s14, 1
      %p31 = por %p29, %p30
      %p32 = scmp.ne.s32.totalorder %s24, %s27
      %p33 = scmp.eq.s32.totalorder %s14, 0
      %p34 = por %p32, %p33
      %p35 = scmp.ne.s32.totalorder %s24, %s27
      %p36 = scmp.eq.s32.totalorder %s19, 1
      %p37 = por %p35, %p36
      %p38 = scmp.ne.s32.totalorder %s27, %s28
      %p39 = scmp.eq.s32.totalorder %s19, 0
      %p40 = por %p38, %p39
      %p41 = scmp.ne.s32.totalorder %s27, %s28
      %p42 = scmp.eq.s32.totalorder %s20, 1
      %p43 = por %p41, %p42
      %p45 = scmp.ne.s32.totalorder %s28, %s44
      %p46 = scmp.eq.s32.totalorder %s20, 0
      %p47 = por %p45, %p46
      %s49 = sadd.s32 %s48, 1
      %p52 = scmp.eq.s32.totalorder %s14, 1
      %p53 = scmp.ne.s32.totalorder %s48, %s50
      %p54 = scmp.eq.s32.totalorder %s14, 0
      %p55 = por %p53, %p54
      %p56 = scmp.ne.s32.totalorder %s48, %s50
      %p57 = scmp.eq.s32.totalorder %s19, 1
      %p58 = por %p56, %p57
      %p59 = scmp.ne.s32.totalorder %s50, %s51
      %p60 = scmp.eq.s32.totalorder %s19, 0
      %p61 = por %p59, %p60
      %p62 = scmp.ne.s32.totalorder %s50, %s51
      %p63 = scmp.eq.s32.totalorder %s20, 1
      %p64 = por %p62, %p63
      %p66 = scmp.ne.s32.totalorder %s51, %s65
      %p67 = scmp.eq.s32.totalorder %s20, 0
      %p68 = por %p66, %p67
      %s70 = sadd.s32 %s69, 1
      %p73 = scmp.eq.s32.totalorder %s14, 1
      %p74 = scmp.ne.s32.totalorder %s69, %s71
      %p75 = scmp.eq.s32.totalorder %s14, 0
      %p76 = por %p74, %p75
      %p77 = scmp.ne.s32.totalorder %s69, %s71
      %p78 = scmp.eq.s32.totalorder %s19, 1
      %p79 = por %p77, %p78
      %p80 = scmp.ne.s32.totalorder %s71, %s72
      %p81 = scmp.eq.s32.totalorder %s19, 0
      %p82 = por %p80, %p81
      %p83 = scmp.ne.s32.totalorder %s71, %s72
      %p84 = scmp.eq.s32.totalorder %s20, 1
      %p85 = por %p83, %p84
      %p87 = scmp.ne.s32.totalorder %s72, %s86
      %p88 = scmp.eq.s32.totalorder %s20, 0
      %p89 = por %p87, %p88
      %s91 = sadd.s32 %s90, 1
      %p94 = scmp.eq.s32.totalorder %s14, 1
      %p95 = scmp.ne.s32.totalorder %s90, %s92
      %p96 = scmp.eq.s32.totalorder %s14, 0
      %p97 = por %p95, %p96
      %p98 = scmp.ne.s32.totalorder %s90, %s92
      %p99 = scmp.eq.s32.totalorder %s19, 1
      %p100 = por %p98, %p99
      %p101 = scmp.ne.s32.totalorder %s92, %s93
      %p102 = scmp.eq.s32.totalorder %s19, 0
      %p103 = por %p101, %p102
      %p104 = scmp.ne.s32.totalorder %s92, %s93
      %p105 = scmp.eq.s32.totalorder %s20, 1
      %p106 = por %p104, %p105
      %p108 = scmp.ne.s32.totalorder %s93, %s107
      %p109 = scmp.eq.s32.totalorder %s20, 0
      %p110 = por %p108, %p109
      %s112 = sadd.s32 %s111, 1
      %p115 = scmp.eq.s32.totalorder %s14, 1
      %p116 = scmp.ne.s32.totalorder %s111, %s113
      %p117 = scmp.eq.s32.totalorder %s14, 0
      %p118 = por %p116, %p117
      %p119 = scmp.ne.s32.totalorder %s111, %s113
      %p120 = scmp.eq.s32.totalorder %s19, 1
      %p121 = por %p119, %p120
      %p122 = scmp.ne.s32.totalorder %s113, %s114
      %p123 = scmp.eq.s32.totalorder %s19, 0
      %p124 = por %p122, %p123
      %p125 = scmp.ne.s32.totalorder %s113, %s114
      %p126 = scmp.eq.s32.totalorder %s20, 1
      %p127 = por %p125, %p126
      %p129 = scmp.ne.s32.totalorder %s114, %s128
      %p130 = scmp.eq.s32.totalorder %s20, 0
      %p131 = por %p129, %p130
      %s132 = ssub.s32 %s14, %s21
      %p133 = scmp.eq.s32.totalorder %s132, 0
      %s135 = sadd.s32 %s134, 1
      %s136 = scalar_select %p133, %s134, %s135
      %p139 = pneg %p133
      %p140 = scmp.eq.s32.totalorder %s14, 1
      %p141 = por %p139, %p140
      %p142 = scmp.ne.s32.totalorder %s134, %s137
      %p143 = scmp.eq.s32.totalorder %s14, 0
      %p144 = por %p142, %p143
      %p145 = scmp.ne.s32.totalorder %s134, %s137
      %p146 = scmp.eq.s32.totalorder %s19, 1
      %p147 = por %p145, %p146
      %p148 = scmp.ne.s32.totalorder %s137, %s138
      %p149 = scmp.eq.s32.totalorder %s19, 0
      %p150 = por %p148, %p149
      %p151 = scmp.ne.s32.totalorder %s137, %s138
      %p152 = scmp.eq.s32.totalorder %s20, 1
      %p153 = por %p151, %p152
      %p155 = scmp.ne.s32.totalorder %s138, %s154
      %p156 = scmp.eq.s32.totalorder %s20, 0
      %p157 = por %p155, %p156
      %p158 = scmp.le.s32.totalorder 1, %s14
      %p159 = scmp.lt.s32.totalorder %s14, 3
      %p160 = pnand %p158, %p159
      %p161 = pneg %p160
      // Predicated region
      $region9: #{net_forward.1} parent=5 // pred_check
        _
      $region10: #{net_forward.1} parent=5 // pred_check_branch
        %163 = sbr.rel (%p160) target = $region12
      $region11: #{net_forward.1} parent=5 // pred_region
        %s164 = ssub.s32 %s14, 1
        // Predicated region
        $region13: #{net_forward.1} parent=11 // pred_check
          %p165 = pneg %p61
        $region14: #{net_forward.1} parent=11 // pred_check_branch
          %167 = sbr.rel (%p165) target = $region16
        $region15: #{net_forward.1} parent=11 // pred_region
          _
        $region16: #{net_forward.1} parent=11 // pred_fallthru
          _
        // Predicated region
        $region17: #{net_forward.1} parent=11 // pred_check
          %p168 = pneg %p82
        $region18: #{net_forward.1} parent=11 // pred_check_branch
          %170 = sbr.rel (%p168) target = $region20
        $region19: #{net_forward.1} parent=11 // pred_region
          _
        $region20: #{net_forward.1} parent=11 // pred_fallthru
          _
        // Predicated region
        $region21: #{net_forward.1} parent=11 // pred_check
          %p171 = pneg %p103
        $region22: #{net_forward.1} parent=11 // pred_check_branch
          %173 = sbr.rel (%p171) target = $region24
        $region23: #{net_forward.1} parent=11 // pred_region
          _
        $region24: #{net_forward.1} parent=11 // pred_fallthru
          _
        // Predicated region
        $region25: #{net_forward.1} parent=11 // pred_check
          %p174 = pneg %p124
        $region26: #{net_forward.1} parent=11 // pred_check_branch
          %176 = sbr.rel (%p174) target = $region28
        $region27: #{net_forward.1} parent=11 // pred_region
          _
        $region28: #{net_forward.1} parent=11 // pred_fallthru
          _
      $region12: #{net_forward.1} parent=5 // pred_fallthru
        _
      %p177 = scmp.lt.s32.totalorder %s14, 2
      // Predicated region
      $region29: #{net_forward.1} parent=5 // pred_check
        %p178 = pneg %p177
      $region30: #{net_forward.1} parent=5 // pred_check_branch
        %180 = sbr.rel (%p178) target = $region32
      $region31: #{net_forward.1} parent=5 // pred_region
        // Predicated region
        $region33: #{net_forward.1} parent=31 // pred_check
          %p181 = pneg %p34
        $region34: #{net_forward.1} parent=31 // pred_check_branch
          %183 = sbr.rel (%p181) target = $region36
        $region35: #{net_forward.1} parent=31 // pred_region
          %s184 = smul.u32 4, %s14
          %p185 = scmp.lt.s32.totalorder %s184, 7
          %s186 = scalar_select %p185, %s184, 7
          %s187 = smul.addr %s186, 4
          %s188 = scalar_lea.vmem %s0, %s187
          %s189 = smul.u32 4, %s14
        $region36: #{net_forward.1} parent=31 // pred_fallthru
          _
      $region32: #{net_forward.1} parent=5 // pred_fallthru
        _
      %p190 = scmp.le.s32.totalorder 1, %s14
      %p191 = scmp.lt.s32.totalorder %s14, 3
      %p192 = pnand %p190, %p191
      %p193 = pneg %p192
      // Predicated region
      $region37: #{net_forward.1} parent=5 // pred_check
        _
      $region38: #{net_forward.1} parent=5 // pred_check_branch
        %195 = sbr.rel (%p192) target = $region40
      $region39: #{net_forward.1} parent=5 // pred_region
        %s196 = ssub.s32 %s14, 1
        %s197 = smul.u32 4, %s19
        %p198 = scmp.lt.s32.totalorder %s197, 7
        %s199 = scalar_select %p198, %s197, 7
        %s200 = smul.addr %s199, 4
        %s201 = scalar_lea.vmem %s0, %s200
        %p202 = pneg %p40
        %p203 = pneg %p37
        %p204 = pneg %p61
        %p205 = pneg %p58
        %p206 = pneg %p82
        %p207 = pneg %p79
        %p208 = pneg %p103
        %p209 = pneg %p100
        %p210 = pneg %p124
        %p211 = pneg %p121
        %p212 = pneg %p150
        %p213 = pneg %p147
        %s214 = sand.u32 %s137, 1
        %s215 = scalar_lea.sflag [#allocation3], %s214
        %s216 = sand.u32 %s137, 1
        %s217 = smul.addr %s216, 8
        %s218 = scalar_lea.vmem [#allocation2], %s217
        %s219 = smul.u32 4, %s19
        %p220 = scmp.lt.s32.totalorder %s219, 7
        %s221 = scalar_select %p220, %s219, 7
        %s222 = smul.addr %s221, 4
        %s223 = scalar_lea.vmem %s0, %s222
        %s224 = smul.u32 4, %s19
        %s225 = smul.u32 4, %s19
        %v226 = vld [vmem:[%s1] sm:$0xff]
        %v227 = vld [vmem:[%s1 + $0x8] sm:$0xff]
        %v228 = vld [vmem:[%s1 + $0x10] sm:$0xff]
        %v229 = vld [vmem:[%s1 + $0x18] sm:$0xff]
        %v230 = vld [vmem:[%s223] sm:$0xff]
        %v231 = vld [vmem:[%s223 + $0x8] sm:$0xff]
        %v232 = vld [vmem:[%s2] sm:$0xff]
        %v233 = vld [vmem:[%s2 + $0x8] sm:$0xff]
        %v234 = vld [vmem:[%s2 + $0x10] sm:$0xff]
        %v235 = vld [vmem:[%s2 + $0x18] sm:$0xff]
        %237 = vset.pattern.permute.xlu0 0
        %238 = vperm.xlu0 %237, %v232
        %v239 = vpop.permute.xlu0 %238
        %242 = vset.pattern.permute.xlu0 0
        %243 = vperm.xlu0 %242, %v233
        %v244 = vpop.permute.xlu0 %243
        %247 = vset.pattern.permute.xlu0 0
        %248 = vperm.xlu0 %247, %v234
        %v249 = vpop.permute.xlu0 %248
        %252 = vset.pattern.permute.xlu0 0
        %253 = vperm.xlu0 %252, %v235
        %v254 = vpop.permute.xlu0 %253
        %v258 = vcombine.high %v230, %v230
        %v259 = vcombine.high %v231, %v231
        %vm260 = vcmask 31744
        %v262 = vsel %vm260, %v226, 0
        %v265 = vsel %vm260, %v227, 0
        %v268 = vsel %vm260, %v228, 0
        %v271 = vsel %vm260, %v229, 0
        %vm273 = vcmask 1043456
        %v274 = vsel %vm273, %v230, 0
        %v276 = vsel %vm273, %v258, 0
        %v278 = vsel %vm273, %v231, 0
        %v280 = vsel %vm273, %v259, 0
        %282 = vmatprep.subr.mxu0 %v276
        %283 = vmatpush1.msra.mxu0 %v274
        %284 = vmatprep.subr.mxu0 0.0
        %285 = vmatpush1.msra.mxu0 0.0
        %286 = vmatprep.subr.mxu0 0.0
        %287 = vmatpush1.msra.mxu0 0.0
        %288 = vmatprep.subr.mxu0 0.0
        %289 = vmatpush1.msra.mxu0 0.0
        %290 = vmatprep.subr.mxu0 0.0
        %291 = vmatpush1.msra.mxu0 0.0
        %292 = vmatprep.subr.mxu0 0.0
        %293 = vmatpush1.msra.mxu0 0.0
        %294 = vmatprep.subr.mxu0 0.0
        %295 = vmatpush1.msra.mxu0 0.0
        %296 = vmatprep.subr.mxu0 0.0
        %297 = vmatpush1.msra.mxu0 0.0
        %298 = vmatprep.subr.mxu0 0.0
        %299 = vmatpush1.msra.mxu0 0.0
        %300 = vmatprep.subr.mxu0 0.0
        %301 = vmatpush1.msra.mxu0 0.0
        %302 = vmatprep.subr.mxu0 0.0
        %303 = vmatpush1.msra.mxu0 0.0
        %304 = vmatprep.subr.mxu0 0.0
        %305 = vmatpush1.msra.mxu0 0.0
        %306 = vmatprep.subr.mxu0 0.0
        %307 = vmatpush1.msra.mxu0 0.0
        %308 = vmatprep.subr.mxu0 0.0
        %309 = vmatpush1.msra.mxu0 0.0
        %310 = vmatprep.subr.mxu0 0.0
        %311 = vmatpush1.msra.mxu0 0.0
        %312 = vmatprep.subr.mxu0 0.0
        %313 = vmatpush1.msra.mxu0 0.0
        %314 = vmatprep.subr.mxu0 0.0
        %315 = vmatpush1.msra.mxu0 0.0
        %316 = vmatprep.subr.mxu0 0.0
        %317 = vmatpush1.msra.mxu0 0.0
        %318 = vmatprep.subr.mxu0 0.0
        %319 = vmatpush1.msra.mxu0 0.0
        %320 = vmatprep.subr.mxu0 0.0
        %321 = vmatpush1.msra.mxu0 0.0
        %322 = vmatprep.subr.mxu0 0.0
        %323 = vmatpush1.msra.mxu0 0.0
        %324 = vmatprep.subr.mxu0 0.0
        %325 = vmatpush1.msra.mxu0 0.0
        %326 = vmatprep.subr.mxu0 0.0
        %327 = vmatpush1.msra.mxu0 0.0
        %328 = vmatprep.subr.mxu0 0.0
        %329 = vmatpush1.msra.mxu0 0.0
        %330 = vmatprep.subr.mxu0 0.0
        %331 = vmatpush1.msra.mxu0 0.0
        %332 = vmatprep.subr.mxu0 0.0
        %333 = vmatpush1.msra.mxu0 0.0
        %334 = vmatprep.subr.mxu0 0.0
        %335 = vmatpush1.msra.mxu0 0.0
        %336 = vmatprep.subr.mxu0 0.0
        %337 = vmatpush1.msra.mxu0 0.0
        %338 = vmatprep.subr.mxu0 0.0
        %339 = vmatpush1.msra.mxu0 0.0
        %340 = vmatprep.subr.mxu0 0.0
        %341 = vmatpush1.msra.mxu0 0.0
        %342 = vmatprep.subr.mxu0 0.0
        %343 = vmatpush1.msra.mxu0 0.0
        %344 = vmatprep.subr.mxu0 0.0
        %345 = vmatpush1.msra.mxu0 0.0
        %346 = vmatprep.mubr.f32.mxu0 0.0
        %347 = vmatmul.mubr.f32.gmra.mrb[0].mxu0 %v262
        %v348 = vpop.f32.mrb[0].mxu0
        %v349 = vadd.f32 %v239, %v348
        %v350 = vpop.f32.mrb[0].mxu0
        %v351 = vadd.f32 %v239, %v350
        %352 = vmatprep.mubr.f32.mxu0 0.0
        %353 = vmatmul.mubr.f32.gmra.mrb[0].mxu0 %v265
        %v354 = vpop.f32.mrb[0].mxu0
        %v355 = vadd.f32 %v244, %v354
        %v356 = vpop.f32.mrb[0].mxu0
        %v357 = vadd.f32 %v244, %v356
        %358 = vmatprep.mubr.f32.mxu0 0.0
        %359 = vmatmul.mubr.f32.gmra.mrb[0].mxu0 %v268
        %v360 = vpop.f32.mrb[0].mxu0
        %v361 = vadd.f32 %v249, %v360
        %v362 = vpop.f32.mrb[0].mxu0
        %v363 = vadd.f32 %v249, %v362
        %364 = vmatprep.mubr.f32.mxu0 0.0
        %365 = vmatmul.mubr.f32.gmra.mrb[0].mxu0 %v271
        %v366 = vpop.f32.mrb[0].mxu0
        %v367 = vadd.f32 %v254, %v366
        %v368 = vpop.f32.mrb[0].mxu0
        %v369 = vadd.f32 %v254, %v368
        %370 = vdwg.mxu0
        %371 = vmatprep.subr.mxu0 %v280
        %372 = vmatpush1.msra.mxu0 %v278
        %373 = vmatprep.subr.mxu0 0.0
        %374 = vmatpush1.msra.mxu0 0.0
        %375 = vmatprep.subr.mxu0 0.0
        %376 = vmatpush1.msra.mxu0 0.0
        %377 = vmatprep.subr.mxu0 0.0
        %378 = vmatpush1.msra.mxu0 0.0
        %379 = vmatprep.subr.mxu0 0.0
        %380 = vmatpush1.msra.mxu0 0.0
        %381 = vmatprep.subr.mxu0 0.0
        %382 = vmatpush1.msra.mxu0 0.0
        %383 = vmatprep.subr.mxu0 0.0
        %384 = vmatpush1.msra.mxu0 0.0
        %385 = vmatprep.subr.mxu0 0.0
        %386 = vmatpush1.msra.mxu0 0.0
        %387 = vmatprep.subr.mxu0 0.0
        %388 = vmatpush1.msra.mxu0 0.0
        %389 = vmatprep.subr.mxu0 0.0
        %390 = vmatpush1.msra.mxu0 0.0
        %391 = vmatprep.subr.mxu0 0.0
        %392 = vmatpush1.msra.mxu0 0.0
        %393 = vmatprep.subr.mxu0 0.0
        %394 = vmatpush1.msra.mxu0 0.0
        %395 = vmatprep.subr.mxu0 0.0
        %396 = vmatpush1.msra.mxu0 0.0
        %397 = vmatprep.subr.mxu0 0.0
        %398 = vmatpush1.msra.mxu0 0.0
        %399 = vmatprep.subr.mxu0 0.0
        %400 = vmatpush1.msra.mxu0 0.0
        %401 = vmatprep.subr.mxu0 0.0
        %402 = vmatpush1.msra.mxu0 0.0
        %403 = vmatprep.subr.mxu0 0.0
        %404 = vmatpush1.msra.mxu0 0.0
        %405 = vmatprep.subr.mxu0 0.0
        %406 = vmatpush1.msra.mxu0 0.0
        %407 = vmatprep.subr.mxu0 0.0
        %408 = vmatpush1.msra.mxu0 0.0
        %409 = vmatprep.subr.mxu0 0.0
        %410 = vmatpush1.msra.mxu0 0.0
        %411 = vmatprep.subr.mxu0 0.0
        %412 = vmatpush1.msra.mxu0 0.0
        %413 = vmatprep.subr.mxu0 0.0
        %414 = vmatpush1.msra.mxu0 0.0
        %415 = vmatprep.subr.mxu0 0.0
        %416 = vmatpush1.msra.mxu0 0.0
        %417 = vmatprep.subr.mxu0 0.0
        %418 = vmatpush1.msra.mxu0 0.0
        %419 = vmatprep.subr.mxu0 0.0
        %420 = vmatpush1.msra.mxu0 0.0
        %421 = vmatprep.subr.mxu0 0.0
        %422 = vmatpush1.msra.mxu0 0.0
        %423 = vmatprep.subr.mxu0 0.0
        %424 = vmatpush1.msra.mxu0 0.0
        %425 = vmatprep.subr.mxu0 0.0
        %426 = vmatpush1.msra.mxu0 0.0
        %427 = vmatprep.subr.mxu0 0.0
        %428 = vmatpush1.msra.mxu0 0.0
        %429 = vmatprep.subr.mxu0 0.0
        %430 = vmatpush1.msra.mxu0 0.0
        %431 = vmatprep.subr.mxu0 0.0
        %432 = vmatpush1.msra.mxu0 0.0
        %433 = vmatprep.subr.mxu0 0.0
        %434 = vmatpush1.msra.mxu0 0.0
        %435 = vmatprep.mubr.f32.mxu0 0.0
        %436 = vmatmul.mubr.f32.gmra.mrb[0].mxu0 %v262
        %v437 = vpop.f32.mrb[0].mxu0
        %v438 = vadd.f32 %v239, %v437
        %v439 = vpop.f32.mrb[0].mxu0
        %v440 = vadd.f32 %v239, %v439
        %441 = vmatprep.mubr.f32.mxu0 0.0
        %442 = vmatmul.mubr.f32.gmra.mrb[0].mxu0 %v265
        %v443 = vpop.f32.mrb[0].mxu0
        %v444 = vadd.f32 %v244, %v443
        %v445 = vpop.f32.mrb[0].mxu0
        %v446 = vadd.f32 %v244, %v445
        %447 = vmatprep.mubr.f32.mxu0 0.0
        %448 = vmatmul.mubr.f32.gmra.mrb[0].mxu0 %v268
        %v449 = vpop.f32.mrb[0].mxu0
        %v450 = vadd.f32 %v249, %v449
        %v451 = vpop.f32.mrb[0].mxu0
        %v452 = vadd.f32 %v249, %v451
        %453 = vmatprep.mubr.f32.mxu0 0.0
        %454 = vmatmul.mubr.f32.gmra.mrb[0].mxu0 %v271
        %v455 = vpop.f32.mrb[0].mxu0
        %v456 = vadd.f32 %v254, %v455
        %v457 = vpop.f32.mrb[0].mxu0
        %v458 = vadd.f32 %v254, %v457
        %459 = vdwg.mxu0
        %v460 = vmax.f32 %v349, 0.0
        %v461 = vmax.f32 %v351, 0.0
        %v462 = vmax.f32 %v438, 0.0
        %v463 = vmax.f32 %v440, 0.0
        %v464 = vmax.f32 %v355, 0.0
        %v465 = vmax.f32 %v357, 0.0
        %v466 = vmax.f32 %v444, 0.0
        %v467 = vmax.f32 %v446, 0.0
        %v468 = vmax.f32 %v361, 0.0
        %v469 = vmax.f32 %v363, 0.0
        %v470 = vmax.f32 %v450, 0.0
        %v471 = vmax.f32 %v452, 0.0
        %v472 = vmax.f32 %v367, 0.0
        %v473 = vmax.f32 %v369, 0.0
        %v474 = vmax.f32 %v456, 0.0
        %v475 = vmax.f32 %v458, 0.0
        %v476 = vld [vmem:[%s3] sm:$0x3]
        %v477 = vld [vmem:[%s4] sm:$0x3]
        %479 = vset.pattern.permute.xlu0 0
        %480 = vperm.xlu0 %479, %v477
        %v481 = vpop.permute.xlu0 %480
        %vm483 = vcmask 261120
        %v485 = vsel %vm483, %v476, 0
        %487 = vmatprep.subr.mxu0 %v461
        %488 = vmatpush1.msra.mxu0 %v460
        %489 = vmatprep.subr.mxu0 %v465
        %490 = vmatpush1.msra.mxu0 %v464
        %491 = vmatprep.subr.mxu0 %v469
        %492 = vmatpush1.msra.mxu0 %v468
        %493 = vmatprep.subr.mxu0 %v473
        %494 = vmatpush1.msra.mxu0 %v472
        %495 = vmatprep.subr.mxu0 0.0
        %496 = vmatpush1.msra.mxu0 0.0
        %497 = vmatprep.subr.mxu0 0.0
        %498 = vmatpush1.msra.mxu0 0.0
        %499 = vmatprep.subr.mxu0 0.0
        %500 = vmatpush1.msra.mxu0 0.0
        %501 = vmatprep.subr.mxu0 0.0
        %502 = vmatpush1.msra.mxu0 0.0
        %503 = vmatprep.subr.mxu0 0.0
        %504 = vmatpush1.msra.mxu0 0.0
        %505 = vmatprep.subr.mxu0 0.0
        %506 = vmatpush1.msra.mxu0 0.0
        %507 = vmatprep.subr.mxu0 0.0
        %508 = vmatpush1.msra.mxu0 0.0
        %509 = vmatprep.subr.mxu0 0.0
        %510 = vmatpush1.msra.mxu0 0.0
        %511 = vmatprep.subr.mxu0 0.0
        %512 = vmatpush1.msra.mxu0 0.0
        %513 = vmatprep.subr.mxu0 0.0
        %514 = vmatpush1.msra.mxu0 0.0
        %515 = vmatprep.subr.mxu0 0.0
        %516 = vmatpush1.msra.mxu0 0.0
        %517 = vmatprep.subr.mxu0 0.0
        %518 = vmatpush1.msra.mxu0 0.0
        %519 = vmatprep.subr.mxu0 0.0
        %520 = vmatpush1.msra.mxu0 0.0
        %521 = vmatprep.subr.mxu0 0.0
        %522 = vmatpush1.msra.mxu0 0.0
        %523 = vmatprep.subr.mxu0 0.0
        %524 = vmatpush1.msra.mxu0 0.0
        %525 = vmatprep.subr.mxu0 0.0
        %526 = vmatpush1.msra.mxu0 0.0
        %527 = vmatprep.subr.mxu0 0.0
        %528 = vmatpush1.msra.mxu0 0.0
        %529 = vmatprep.subr.mxu0 0.0
        %530 = vmatpush1.msra.mxu0 0.0
        %531 = vmatprep.subr.mxu0 0.0
        %532 = vmatpush1.msra.mxu0 0.0
        %533 = vmatprep.subr.mxu0 0.0
        %534 = vmatpush1.msra.mxu0 0.0
        %535 = vmatprep.subr.mxu0 0.0
        %536 = vmatpush1.msra.mxu0 0.0
        %537 = vmatprep.subr.mxu0 0.0
        %538 = vmatpush1.msra.mxu0 0.0
        %539 = vmatprep.subr.mxu0 0.0
        %540 = vmatpush1.msra.mxu0 0.0
        %541 = vmatprep.subr.mxu0 0.0
        %542 = vmatpush1.msra.mxu0 0.0
        %543 = vmatprep.subr.mxu0 0.0
        %544 = vmatpush1.msra.mxu0 0.0
        %545 = vmatprep.subr.mxu0 0.0
        %546 = vmatpush1.msra.mxu0 0.0
        %547 = vmatprep.subr.mxu0 0.0
        %548 = vmatpush1.msra.mxu0 0.0
        %549 = vmatprep.subr.mxu0 0.0
        %550 = vmatpush1.msra.mxu0 0.0
        %551 = vmatprep.mubr.f32.mxu0 0.0
        %552 = vmatmul.mubr.f32.gmra.mrb[0].mxu0 %v485
        %v553 = vpop.f32.mrb[0].mxu0
        %v554 = vadd.f32 %v481, %v553
        %v555 = vpop.f32.mrb[0].mxu0
        %v556 = vadd.f32 %v481, %v555
        %557 = vdwg.mxu0
        %558 = vmatprep.subr.mxu0 %v463
        %559 = vmatpush1.msra.mxu0 %v462
        %560 = vmatprep.subr.mxu0 %v467
        %561 = vmatpush1.msra.mxu0 %v466
        %562 = vmatprep.subr.mxu0 %v471
        %563 = vmatpush1.msra.mxu0 %v470
        %564 = vmatprep.subr.mxu0 %v475
        %565 = vmatpush1.msra.mxu0 %v474
        %566 = vmatprep.subr.mxu0 0.0
        %567 = vmatpush1.msra.mxu0 0.0
        %568 = vmatprep.subr.mxu0 0.0
        %569 = vmatpush1.msra.mxu0 0.0
        %570 = vmatprep.subr.mxu0 0.0
        %571 = vmatpush1.msra.mxu0 0.0
        %572 = vmatprep.subr.mxu0 0.0
        %573 = vmatpush1.msra.mxu0 0.0
        %574 = vmatprep.subr.mxu0 0.0
        %575 = vmatpush1.msra.mxu0 0.0
        %576 = vmatprep.subr.mxu0 0.0
        %577 = vmatpush1.msra.mxu0 0.0
        %578 = vmatprep.subr.mxu0 0.0
        %579 = vmatpush1.msra.mxu0 0.0
        %580 = vmatprep.subr.mxu0 0.0
        %581 = vmatpush1.msra.mxu0 0.0
        %582 = vmatprep.subr.mxu0 0.0
        %583 = vmatpush1.msra.mxu0 0.0
        %584 = vmatprep.subr.mxu0 0.0
        %585 = vmatpush1.msra.mxu0 0.0
        %586 = vmatprep.subr.mxu0 0.0
        %587 = vmatpush1.msra.mxu0 0.0
        %588 = vmatprep.subr.mxu0 0.0
        %589 = vmatpush1.msra.mxu0 0.0
        %590 = vmatprep.subr.mxu0 0.0
        %591 = vmatpush1.msra.mxu0 0.0
        %592 = vmatprep.subr.mxu0 0.0
        %593 = vmatpush1.msra.mxu0 0.0
        %594 = vmatprep.subr.mxu0 0.0
        %595 = vmatpush1.msra.mxu0 0.0
        %596 = vmatprep.subr.mxu0 0.0
        %597 = vmatpush1.msra.mxu0 0.0
        %598 = vmatprep.subr.mxu0 0.0
        %599 = vmatpush1.msra.mxu0 0.0
        %600 = vmatprep.subr.mxu0 0.0
        %601 = vmatpush1.msra.mxu0 0.0
        %602 = vmatprep.subr.mxu0 0.0
        %603 = vmatpush1.msra.mxu0 0.0
        %604 = vmatprep.subr.mxu0 0.0
        %605 = vmatpush1.msra.mxu0 0.0
        %606 = vmatprep.subr.mxu0 0.0
        %607 = vmatpush1.msra.mxu0 0.0
        %608 = vmatprep.subr.mxu0 0.0
        %609 = vmatpush1.msra.mxu0 0.0
        %610 = vmatprep.subr.mxu0 0.0
        %611 = vmatpush1.msra.mxu0 0.0
        %612 = vmatprep.subr.mxu0 0.0
        %613 = vmatpush1.msra.mxu0 0.0
        %614 = vmatprep.subr.mxu0 0.0
        %615 = vmatpush1.msra.mxu0 0.0
        %616 = vmatprep.subr.mxu0 0.0
        %617 = vmatpush1.msra.mxu0 0.0
        %618 = vmatprep.subr.mxu0 0.0
        %619 = vmatpush1.msra.mxu0 0.0
        %620 = vmatprep.subr.mxu0 0.0
        %621 = vmatpush1.msra.mxu0 0.0
        %622 = vmatprep.mubr.f32.mxu0 0.0
        %623 = vmatmul.mubr.f32.gmra.mrb[0].mxu0 %v485
        %v624 = vpop.f32.mrb[0].mxu0
        %v625 = vadd.f32 %v481, %v624
        %v626 = vpop.f32.mrb[0].mxu0
        %v627 = vadd.f32 %v481, %v626
        %628 = vdwg.mxu0
        %vm629 = vcmask 1041408
        %v630 = vsel %vm629, %v554, -inf
        %v631 = vrot.slane %v630, 4
        %v632 = vmax.f32 %v630, %v631
        %v633 = vrot.slane %v632, 2
        %v634 = vmax.f32 %v632, %v633
        %v635 = vrot.slane %v634, 1
        %v636 = vmax.f32 %v634, %v635
        %v637 = vsel %vm629, %v556, -inf
        %v638 = vrot.slane %v637, 4
        %v639 = vmax.f32 %v637, %v638
        %v640 = vrot.slane %v639, 2
        %v641 = vmax.f32 %v639, %v640
        %v642 = vrot.slane %v641, 1
        %v643 = vmax.f32 %v641, %v642
        %v644 = vsel %vm629, %v625, -inf
        %v645 = vrot.slane %v644, 4
        %v646 = vmax.f32 %v644, %v645
        %v647 = vrot.slane %v646, 2
        %v648 = vmax.f32 %v646, %v647
        %v649 = vrot.slane %v648, 1
        %v650 = vmax.f32 %v648, %v649
        %v651 = vsel %vm629, %v627, -inf
        %v652 = vrot.slane %v651, 4
        %v653 = vmax.f32 %v651, %v652
        %v654 = vrot.slane %v653, 2
        %v655 = vmax.f32 %v653, %v654
        %v656 = vrot.slane %v655, 1
        %v657 = vmax.f32 %v655, %v656
        %v658 = vsub.f32 %v554, %v636
        %v659 = vsub.f32 %v556, %v643
        %v660 = vsub.f32 %v625, %v650
        %v661 = vsub.f32 %v627, %v657
        %v662 = vmul.f32 %v658, 1.442695
        %v663 = vpow.pop %v662
        %v664 = vmul.f32 %v659, 1.442695
        %v665 = vpow.pop %v664
        %v666 = vmul.f32 %v660, 1.442695
        %v667 = vpow.pop %v666
        %v668 = vmul.f32 %v661, 1.442695
        %v669 = vpow.pop %v668
        %v670 = vsel %vm629, %v663, 0.0
        %v671 = vrot.slane %v670, 4
        %v672 = vadd.f32 %v670, %v671
        %v673 = vrot.slane %v672, 2
        %v674 = vadd.f32 %v672, %v673
        %v675 = vrot.slane %v674, 1
        %v676 = vadd.f32 %v674, %v675
        %v677 = vsel %vm629, %v665, 0.0
        %v678 = vrot.slane %v677, 4
        %v679 = vadd.f32 %v677, %v678
        %v680 = vrot.slane %v679, 2
        %v681 = vadd.f32 %v679, %v680
        %v682 = vrot.slane %v681, 1
        %v683 = vadd.f32 %v681, %v682
        %v684 = vsel %vm629, %v667, 0.0
        %v685 = vrot.slane %v684, 4
        %v686 = vadd.f32 %v684, %v685
        %v687 = vrot.slane %v686, 2
        %v688 = vadd.f32 %v686, %v687
        %v689 = vrot.slane %v688, 1
        %v690 = vadd.f32 %v688, %v689
        %v691 = vsel %vm629, %v669, 0.0
        %v692 = vrot.slane %v691, 4
        %v693 = vadd.f32 %v691, %v692
        %v694 = vrot.slane %v693, 2
        %v695 = vadd.f32 %v693, %v694
        %v696 = vrot.slane %v695, 1
        %v697 = vadd.f32 %v695, %v696
        %v698 = vrcp.pop %v676
        %v699 = vmul.f32 %v663, %v698
        %v700 = vrcp.pop %v683
        %v701 = vmul.f32 %v665, %v700
        %v702 = vrcp.pop %v690
        %v703 = vmul.f32 %v667, %v702
        %v704 = vrcp.pop %v697
        %v705 = vmul.f32 %v669, %v704
        %v710 = vcombine.low %v699, %v701
        %v711 = vcombine.low %v703, %v705
        %v713 = vunpack.c.l.s4 1983009808
        %v714 = vunpack.c.0.s8 %v713
        %v715 = vlaneseq
        %v716 = vshrl.u32 %v715, 7
        %v717 = vsub.s32 %v714, %v716
        %v718 = vrot.slane %v710, %v717
        %v720 = vunpack.c.l.s4 1983009808
        %v721 = vunpack.c.0.s8 %v720
        %v722 = vlaneseq
        %v723 = vshrl.u32 %v722, 7
        %v724 = vsub.s32 %v721, %v723
        %v725 = vrot.slane %v711, %v724
        %v726 = vcombine.low %v718, %v725
        %728 = vst [vmem:[%s218] sm:$0xff] %v726
        %s729 = sand.u32 %s137, 1
        %s730 = scalar_lea.sflag [#allocation3], %s729
        %s731 = sand.u32 %s137, 1
        %s732 = smul.addr %s731, 8
        %s733 = scalar_lea.vmem [#allocation2], %s732
        // Predicated region
        $region41: #{net_forward.1} parent=39 // pred_check
          %p734 = pneg %p147
        $region42: #{net_forward.1} parent=39 // pred_check_branch
          %736 = sbr.rel (%p734) target = $region44
        $region43: #{net_forward.1} parent=39 // pred_region
          %s737 = smul.u32 4, %s19
          %s739 = ssub.s32 128, 128
          %740 = vsyncadd %s730, %s739
          %s741 = smul.addr %s737, 32
          %s742 = scalar_lea.hbm %s5, %s741
          %s744 = sshll.u32 %s733, 4
          %s745 = int_to_ptr.vmem [resolvable:$true] %s744
          %747 = dma.vmem_to_hbm [thread:$0]  %s745, 128, %s742, %s730
        $region44: #{net_forward.1} parent=39 // pred_fallthru
          _
      $region40: #{net_forward.1} parent=5 // pred_fallthru
        _
      %p748 = scmp.le.s32.totalorder 2, %s14
      // Predicated region
      $region45: #{net_forward.1} parent=5 // pred_check
        %p749 = pneg %p748
      $region46: #{net_forward.1} parent=5 // pred_check_branch
        %751 = sbr.rel (%p749) target = $region48
      $region47: #{net_forward.1} parent=5 // pred_region
        %s752 = ssub.s32 %s14, 2
        // Predicated region
        $region49: #{net_forward.1} parent=47 // pred_check
          %p753 = pneg %p153
        $region50: #{net_forward.1} parent=47 // pred_check_branch
          %755 = sbr.rel (%p753) target = $region52
        $region51: #{net_forward.1} parent=47 // pred_region
          %s756 = sand.u32 %s138, 1
          %s757 = scalar_lea.sflag [#allocation3], %s756
          %s758 = sand.u32 %s138, 1
          %s759 = smul.addr %s758, 8
          %s760 = scalar_lea.vmem [#allocation2], %s759
          %761 = dma.done %s757, 128
        $region52: #{net_forward.1} parent=47 // pred_fallthru
          _
      $region48: #{net_forward.1} parent=5 // pred_fallthru
        _
    $region6: #{net_forward.1} parent=1 // loop_footer
      %s18 = sadd.s32 1, %s14
    $region7: #{net_forward.1} parent=1 // loop_footer_branch
      %13 = sbr.rel target = $region3
    $region8: #{net_forward.1} parent=1 // loop_exit
      _
    %762 = vsyncpa [#allocation3], 1
    %s763 = scalar_lea.sflag [#allocation3], 1
    %764 = vsyncpa %s763, 1

</llo_original>
